<compile_context>
chip_gen: v7x
topology: tpu7x:2x2x1
jax: 0.10.0
libtpu: 0.0.40
codegen_flags: <defaults>
</compile_context>

<pallas_src>
import functools

import jax
import jax.numpy as jnp
from jax.experimental import pallas as pl
from jax.experimental.pallas import tpu as pltpu

NUM_LAYERS = 2   # matches `layer = 2` in the PyTorch script
WIDTH = 30       # matches `width = 30`

LANE = 128       # TPU lane width (batch axis)
IN_FEATS = 2     # input features, kept un-padded
WIDTH_PAD = 32   # 30 -> 32 (sublane aligned; lane axis is the batch)
MAX_BLOCK_N = 4096

_HIGHEST = jax.lax.Precision.HIGHEST


def _mlp_kernel(num_hidden, x_ref, *refs):
    """Fused MLP in feature-major layout.

    refs = (w0, b0, w1, b1, ..., wf_col, bf, o_ref)
      w0      : [WIDTH_PAD, 2]        b0, b_i : [WIDTH_PAD, 1]
      w_i     : [WIDTH_PAD, WIDTH_PAD]
      wf_col  : [WIDTH_PAD, 1]  (final weight stored transposed)
      bf      : [1, 1]
    Activations are [features, batch_block].
    """
    o_ref = refs[-1]
    p = refs[:-1]

    x = x_ref[...]                                   # [2, block_n]
    w0 = p[0][...]                                   # [WIDTH_PAD, 2]
    b0 = p[1][...]                                   # [WIDTH_PAD, 1]
    # Layer 0: contraction dim is only 2 -> two broadcast FMAs on the VPU
    # instead of a mostly-padding MXU pass.
    h = jnp.tanh(w0[:, 0:1] * x[0:1, :] + w0[:, 1:2] * x[1:2, :] + b0)

    for li in range(1, num_hidden):
        w = p[2 * li][...]                           # [WIDTH_PAD, WIDTH_PAD]
        b = p[2 * li + 1][...]                       # [WIDTH_PAD, 1]
        h = jnp.tanh(
            jnp.dot(w, h, preferred_element_type=jnp.float32,
                    precision=_HIGHEST) + b
        )

    wf = p[2 * num_hidden][...]                      # [WIDTH_PAD, 1]
    bf = p[2 * num_hidden + 1][...]                  # [1, 1]
    # Final layer: out-dim 1 -> lane-wise multiply + sublane reduction.
    o_ref[...] = (jnp.sum(wf * h, axis=0, keepdims=True) + bf).astype(o_ref.dtype)


def _pad_params(params):
    """PyTorch-shaped (w [out,in], b [out]) -> tight zero-padded kernel layout.

    First/hidden layers keep [out, in] orientation padded to WIDTH_PAD rows
    (and WIDTH_PAD cols for hidden); the final 1-row weight is passed as a
    transposed [WIDTH_PAD, 1] column.  Padding is exact: tanh(0)=0 and padded
    rows/cols are zero.
    """
    flat = []
    *hidden, (wf, bf) = params
    for (w, b) in hidden:
        out_d, in_d = w.shape
        in_p = in_d if in_d == IN_FEATS else WIDTH_PAD
        w_p = jnp.zeros((WIDTH_PAD, in_p), jnp.float32).at[:out_d, :in_d].set(w)
        b_p = jnp.zeros((WIDTH_PAD, 1), jnp.float32).at[:out_d, 0].set(b)
        flat += [w_p, b_p]
    wf_col = jnp.zeros((WIDTH_PAD, 1), jnp.float32).at[: wf.shape[1], 0].set(wf[0])
    bf_p = jnp.asarray(bf, jnp.float32).reshape(1, 1)
    flat += [wf_col, bf_p]
    return flat


def mlp_forward(x, params, *, block_n=MAX_BLOCK_N):
    """x: [N, 2] float32. params: PyTorch-style [(w [out,in], b [out]), ...]."""
    N = x.shape[0]
    num_hidden = len(params) - 1

    # Batch tile: multiple of 128 lanes.  Large tiles amortize the ~0.35us
    # per-grid-step overhead; the live [WIDTH_PAD, block_n] f32 activation is
    # VMEM scratch (<=0.5 MiB at block_n=4096), far below every generation's
    # VMEM limit.
    n_lane = ((N + LANE - 1) // LANE) * LANE
    block_n = max(LANE, (min(block_n, MAX_BLOCK_N, n_lane) // LANE) * LANE)
    # Keep at least 2 grid steps when the batch allows so both TensorCores of
    # a v7x chip get work (parallel axis); no cost on single-TC v5e/v6e.
    if n_lane >= 2 * LANE and n_lane // block_n < 2:
        block_n = max(LANE, ((n_lane // 2) // LANE) * LANE)
    n_pad = ((n_lane + block_n - 1) // block_n) * block_n

    # Feature-major input [2, n_pad]: a plain transpose + batch pad (no
    # feature padding, no zeros+scatter).
    # TODO(synk): produce x feature-major upstream to drop this prep op.
    x_t = jnp.pad(x.T.astype(jnp.float32), ((0, 0), (0, n_pad - N)))

    flat = _pad_params(params)

    x_spec = pl.BlockSpec((IN_FEATS, block_n), lambda i: (0, i))
    # Constant block index -> parameter tiles are fetched once, not re-streamed.
    param_specs = [pl.BlockSpec(p.shape, lambda i: (0, 0)) for p in flat]
    out_spec = pl.BlockSpec((1, block_n), lambda i: (0, i))

    kernel = functools.partial(_mlp_kernel, num_hidden)

    out_t = pl.pallas_call(
        kernel,
        out_shape=jax.ShapeDtypeStruct((1, n_pad), jnp.float32),
        grid_spec=pltpu.PrefetchScalarGridSpec(
            num_scalar_prefetch=0,
            grid=(n_pad // block_n,),
            in_specs=[x_spec] + param_specs,
            out_specs=out_spec,
        ),
        compiler_params=pltpu.CompilerParams(
            dimension_semantics=("parallel",),
        ),
    )(x_t, *flat)

    # Back to the PyTorch output layout [N, 1].
    return out_t[0, :N][:, None]


def init_params(key, num_layers, width):
    """Deterministic init mirroring nn.Linear defaults, PyTorch [out, in] layout."""
    dims = [(width, 2)] + [(width, width)] * (num_layers - 1) + [(1, width)]
    params = []
    for (fan_out, fan_in) in dims:
        key, kw, kb = jax.random.split(key, 3)
        bound = 1.0 / jnp.sqrt(jnp.float32(fan_in))
        w = jax.random.uniform(kw, (fan_out, fan_in), jnp.float32, -bound, bound)
        b = jax.random.uniform(kb, (fan_out,), jnp.float32, -bound, bound)
        params.append((w, b))
    return params


def reference_forward(x, params):
    """Plain-JAX reference for correctness checking (batch-major, like PyTorch)."""
    h = x
    for (w, b) in params[:-1]:
        h = jnp.tanh(jnp.dot(h, w.T, precision=_HIGHEST) + b)
    wf, bf = params[-1]
    return jnp.dot(h, wf.T, precision=_HIGHEST) + bf


if __name__ == "__main__":
    key = jax.random.PRNGKey(0)
    key, kx = jax.random.split(key)

    N = 128  # small batch of (x, t) collocation points
    x = jax.random.normal(kx, (N, 2), jnp.float32)

    params = init_params(key, NUM_LAYERS, WIDTH)

    out = mlp_forward(x, params)
    out = jax.block_until_ready(out)

    ref = reference_forward(x, params)
    assert out.shape == (N, 1), out.shape
    assert jnp.allclose(out, ref, atol=1e-5, rtol=1e-5), "mismatch vs reference"

    print("KERNEL_OK")
</pallas_src>

<mosaic_0001>
module attributes {stable_mosaic.version = 11 : i64} {
  func.func @_mlp_kernel(%arg0: i32, %arg1: memref<2x128xf32, #tpu.memory_space<vmem>>, %arg2: memref<32x2xf32, #tpu.memory_space<vmem>>, %arg3: memref<32x1xf32, #tpu.memory_space<vmem>>, %arg4: memref<32x32xf32, #tpu.memory_space<vmem>>, %arg5: memref<32x1xf32, #tpu.memory_space<vmem>>, %arg6: memref<32x1xf32, #tpu.memory_space<vmem>>, %arg7: memref<1x1xf32, #tpu.memory_space<vmem>>, %arg8: memref<1x128xf32, #tpu.memory_space<vmem>>) attributes {dimension_semantics = [#tpu.dimension_semantics<parallel>], iteration_bounds = array<i64: 1>, scalar_prefetch = 0 : i64, scratch_operands = 0 : i64, tpu.core_type = #tpu.core_type<tc>, window_params = [{transform_indices = @transform_0, window_bounds = array<i64: 2, 128>}, {pipeline_mode = #tpu.pipeline_mode<synchronous>, transform_indices = @transform_1, window_bounds = array<i64: 32, 2>}, {pipeline_mode = #tpu.pipeline_mode<synchronous>, transform_indices = @transform_2, window_bounds = array<i64: 32, 1>}, {pipeline_mode = #tpu.pipeline_mode<synchronous>, transform_indices = @transform_3, window_bounds = array<i64: 32, 32>}, {pipeline_mode = #tpu.pipeline_mode<synchronous>, transform_indices = @transform_4, window_bounds = array<i64: 32, 1>}, {pipeline_mode = #tpu.pipeline_mode<synchronous>, transform_indices = @transform_5, window_bounds = array<i64: 32, 1>}, {pipeline_mode = #tpu.pipeline_mode<synchronous>, transform_indices = @transform_6, window_bounds = array<i64: 1, 1>}, {transform_indices = @transform_7, window_bounds = array<i64: 1, 128>}]} {
    %c0 = arith.constant 0 : index
    %c0_0 = arith.constant 0 : index
    %0 = vector.load %arg1[%c0, %c0_0] : memref<2x128xf32, #tpu.memory_space<vmem>>, vector<2x128xf32>
    %c0_1 = arith.constant 0 : index
    %c0_2 = arith.constant 0 : index
    %1 = vector.load %arg2[%c0_1, %c0_2] : memref<32x2xf32, #tpu.memory_space<vmem>>, vector<32x2xf32>
    %c0_3 = arith.constant 0 : index
    %c0_4 = arith.constant 0 : index
    %2 = vector.load %arg3[%c0_3, %c0_4] : memref<32x1xf32, #tpu.memory_space<vmem>>, vector<32x1xf32>
    %3 = vector.extract_strided_slice %1 {offsets = [0, 0], sizes = [32, 1], strides = [1, 1]} : vector<32x2xf32> to vector<32x1xf32>
    %4 = vector.extract_strided_slice %0 {offsets = [0, 0], sizes = [1, 128], strides = [1, 1]} : vector<2x128xf32> to vector<1x128xf32>
    %5 = vector.broadcast %3 : vector<32x1xf32> to vector<32x128xf32>
    %6 = vector.broadcast %4 : vector<1x128xf32> to vector<32x128xf32>
    %7 = arith.mulf %5, %6 : vector<32x128xf32>
    %8 = vector.extract_strided_slice %1 {offsets = [0, 1], sizes = [32, 1], strides = [1, 1]} : vector<32x2xf32> to vector<32x1xf32>
    %9 = vector.extract_strided_slice %0 {offsets = [1, 0], sizes = [1, 128], strides = [1, 1]} : vector<2x128xf32> to vector<1x128xf32>
    %10 = vector.broadcast %8 : vector<32x1xf32> to vector<32x128xf32>
    %11 = vector.broadcast %9 : vector<1x128xf32> to vector<32x128xf32>
    %12 = arith.mulf %10, %11 : vector<32x128xf32>
    %13 = arith.addf %7, %12 : vector<32x128xf32>
    %14 = vector.broadcast %2 : vector<32x1xf32> to vector<32x128xf32>
    %15 = arith.addf %13, %14 : vector<32x128xf32>
    %16 = math.tanh %15 : vector<32x128xf32>
    %c0_5 = arith.constant 0 : index
    %c0_6 = arith.constant 0 : index
    %17 = vector.load %arg4[%c0_5, %c0_6] : memref<32x32xf32, #tpu.memory_space<vmem>>, vector<32x32xf32>
    %c0_7 = arith.constant 0 : index
    %c0_8 = arith.constant 0 : index
    %18 = vector.load %arg5[%c0_7, %c0_8] : memref<32x1xf32, #tpu.memory_space<vmem>>, vector<32x1xf32>
    %cst = arith.constant dense<0.000000e+00> : vector<32x128xf32>
    %19 = tpu.matmul %17, %16, %cst {dimension_numbers = #tpu.dot_dimension_numbers<[1], [0], [0], [1], [0, 0, 1, 1], [], []>, precision = #tpu.contract_precision<fp32>} : vector<32x32xf32>, vector<32x128xf32>, vector<32x128xf32> -> vector<32x128xf32>
    %20 = vector.broadcast %18 : vector<32x1xf32> to vector<32x128xf32>
    %21 = arith.addf %19, %20 : vector<32x128xf32>
    %22 = math.tanh %21 : vector<32x128xf32>
    %c0_9 = arith.constant 0 : index
    %c0_10 = arith.constant 0 : index
    %23 = vector.load %arg6[%c0_9, %c0_10] : memref<32x1xf32, #tpu.memory_space<vmem>>, vector<32x1xf32>
    %c0_11 = arith.constant 0 : index
    %c0_12 = arith.constant 0 : index
    %24 = vector.load %arg7[%c0_11, %c0_12] : memref<1x1xf32, #tpu.memory_space<vmem>>, vector<1x1xf32>
    %25 = vector.broadcast %23 : vector<32x1xf32> to vector<32x128xf32>
    %26 = arith.mulf %25, %22 : vector<32x128xf32>
    %cst_13 = arith.constant dense<0.000000e+00> : vector<128xf32>
    %27 = vector.multi_reduction <add>, %26, %cst_13 [0] : vector<32x128xf32> to vector<128xf32>
    %28 = vector.shape_cast %27 : vector<128xf32> to vector<1x128xf32>
    %29 = vector.broadcast %24 : vector<1x1xf32> to vector<1x128xf32>
    %30 = arith.addf %28, %29 : vector<1x128xf32>
    %c0_14 = arith.constant 0 : index
    %c0_15 = arith.constant 0 : index
    %31 = vector.load %arg8[%c0_14, %c0_15] : memref<1x128xf32, #tpu.memory_space<vmem>>, vector<1x128xf32>
    tpu.vector_store %arg8[%c0_14, %c0_15], %30 {strides = array<i32>} : memref<1x128xf32, #tpu.memory_space<vmem>>, vector<1x128xf32>,
    return
  }
  func.func @transform_0(%arg0: i32) -> (i32, i32) {
    %c0_i32 = arith.constant 0 : i32
    %c0_i32_0 = arith.constant 0 : i32
    return %c0_i32, %arg0 : i32, i32
  }
  func.func @transform_1(%arg0: i32) -> (i32, i32) {
    %c0_i32 = arith.constant 0 : i32
    %c0_i32_0 = arith.constant 0 : i32
    %c0_i32_1 = arith.constant 0 : i32
    return %c0_i32, %c0_i32_0 : i32, i32
  }
  func.func @transform_2(%arg0: i32) -> (i32, i32) {
    %c0_i32 = arith.constant 0 : i32
    %c0_i32_0 = arith.constant 0 : i32
    %c0_i32_1 = arith.constant 0 : i32
    return %c0_i32, %c0_i32_0 : i32, i32
  }
  func.func @transform_3(%arg0: i32) -> (i32, i32) {
    %c0_i32 = arith.constant 0 : i32
    %c0_i32_0 = arith.constant 0 : i32
    %c0_i32_1 = arith.constant 0 : i32
    return %c0_i32, %c0_i32_0 : i32, i32
  }
  func.func @transform_4(%arg0: i32) -> (i32, i32) {
    %c0_i32 = arith.constant 0 : i32
    %c0_i32_0 = arith.constant 0 : i32
    %c0_i32_1 = arith.constant 0 : i32
    return %c0_i32, %c0_i32_0 : i32, i32
  }
  func.func @transform_5(%arg0: i32) -> (i32, i32) {
    %c0_i32 = arith.constant 0 : i32
    %c0_i32_0 = arith.constant 0 : i32
    %c0_i32_1 = arith.constant 0 : i32
    return %c0_i32, %c0_i32_0 : i32, i32
  }
  func.func @transform_6(%arg0: i32) -> (i32, i32) {
    %c0_i32 = arith.constant 0 : i32
    %c0_i32_0 = arith.constant 0 : i32
    %c0_i32_1 = arith.constant 0 : i32
    return %c0_i32, %c0_i32_0 : i32, i32
  }
  func.func @transform_7(%arg0: i32) -> (i32, i32) {
    %c0_i32 = arith.constant 0 : i32
    %c0_i32_0 = arith.constant 0 : i32
    return %c0_i32, %arg0 : i32, i32
  }
}

</mosaic_0001>

<llo_original>
// kernel: tpu_custom_call.1
$region0: #{tpu_custom_call.1}
  #allocation0 [shape = 'u32[]', space=smem, size = 0x4, offset = 0x4, fixed_abs, tag = 'smem constant byte address 0x4 - core index']
  #allocation1 [shape = 'u32[144,128]{1,0:T(1,128)}', space=vmem, size = 0x12000, scoped, tag = 'internal scratch']
  #allocation2 [shape = 'f32[1,1]{1,0:T(1,128)S(1)}', space=vmem, size = 0x200, scoped, tag = 'scoped memory for tpu_custom_call.1']
  %s0 = inlined_call_operand.vmem [shape: f32[2,128], index: 0, kind: input, shape index: {}]
  %s1 = inlined_call_operand.vmem [shape: f32[32,2], index: 1, kind: input, shape index: {}]
  %s2 = inlined_call_operand.vmem [shape: f32[32,1], index: 2, kind: input, shape index: {}]
  %s3 = inlined_call_operand.vmem [shape: f32[32,32], index: 3, kind: input, shape index: {}]
  %s4 = inlined_call_operand.vmem [shape: f32[32,1], index: 4, kind: input, shape index: {}]
  %s5 = inlined_call_operand.vmem [shape: f32[32,1], index: 5, kind: input, shape index: {}]
  %s6 = inlined_call_operand.<no memory space> [shape: f32[1,1], index: 6, kind: input, shape index: {}]
  %s7 = inlined_call_operand.hbm [shape: f32[1,128], index: 7, kind: output, shape index: {}]
  %s8 = sld [smem:[#allocation0]]
  $region38: #{tpu_custom_call.1} parent=0
    _
  %s10 = ssub.s32 1, %s8
  %s11 = scalar_select 0, %s10, %s8
  %v12 = vstv %s6
  %13 = vst [vmem:[#allocation2] sm:$0x1] %v12
  $region1: #{tpu_custom_call.1} parent=0
    #allocation3 [shape = 'u8[512]{0}', space=vmem, size = 0x400, scoped, tag = 'output window, operand 0, single buffered']
    #allocation4 [shape = 's32[1]{0}', space=sflag, size = 0x4, scoped, tag = 'scoped memory for tpu_custom_call.1']
    %14 = vsyncpa [#allocation4], 0
    // Predicated region
    $region2: #{tpu_custom_call.1} parent=1 // pred_check
      _
    $region3: #{tpu_custom_call.1} parent=1 // pred_check_branch
      %16 = sbr.rel (0) target = $region5
    $region4: #{tpu_custom_call.1} parent=1 // pred_region
      _
    $region5: #{tpu_custom_call.1} parent=1 // pred_fallthru
      _
    // Predicated region
    $region6: #{tpu_custom_call.1} parent=1 // pred_check
      _
    $region7: #{tpu_custom_call.1} parent=1 // pred_check_branch
      %18 = sbr.rel (0) target = $region9
    $region8: #{tpu_custom_call.1} parent=1 // pred_region
      _
    $region9: #{tpu_custom_call.1} parent=1 // pred_fallthru
      _
    // Predicated region
    $region10: #{tpu_custom_call.1} parent=1 // pred_check
      _
    $region11: #{tpu_custom_call.1} parent=1 // pred_check_branch
      %20 = sbr.rel (0) target = $region13
    $region12: #{tpu_custom_call.1} parent=1 // pred_region
      _
    $region13: #{tpu_custom_call.1} parent=1 // pred_fallthru
      _
    // Predicated region
    $region14: #{tpu_custom_call.1} parent=1 // pred_check
      _
    $region15: #{tpu_custom_call.1} parent=1 // pred_check_branch
      %22 = sbr.rel (0) target = $region17
    $region16: #{tpu_custom_call.1} parent=1 // pred_region
      _
    $region17: #{tpu_custom_call.1} parent=1 // pred_fallthru
      _
    // Predicated region
    $region18: #{tpu_custom_call.1} parent=1 // pred_check
      _
    $region19: #{tpu_custom_call.1} parent=1 // pred_check_branch
      %24 = sbr.rel (0) target = $region21
    $region20: #{tpu_custom_call.1} parent=1 // pred_region
      _
    $region21: #{tpu_custom_call.1} parent=1 // pred_fallthru
      _
    // Predicated region
    $region22: #{tpu_custom_call.1} parent=1 // pred_check
      _
    $region23: #{tpu_custom_call.1} parent=1 // pred_check_branch
      %26 = sbr.rel (0) target = $region25
    $region24: #{tpu_custom_call.1} parent=1 // pred_region
      _
    $region25: #{tpu_custom_call.1} parent=1 // pred_fallthru
      _
    // Predicated region
    $region26: #{tpu_custom_call.1} parent=1 // pred_check
      _
    $region27: #{tpu_custom_call.1} parent=1 // pred_check_branch
      %28 = sbr.rel (0) target = $region29
    $region28: #{tpu_custom_call.1} parent=1 // pred_region
      _
    $region29: #{tpu_custom_call.1} parent=1 // pred_fallthru
      _
    %v29 = vld [vmem:[%s0] sm:$0x3]
    %v30 = vld [vmem:[%s1] sm:$0xff]
    %v31 = vld [vmem:[%s1 + $0x8] sm:$0xff]
    %v32 = vld [vmem:[%s1 + $0x10] sm:$0xff]
    %v33 = vld [vmem:[%s1 + $0x18] sm:$0xff]
    %v34 = vld [vmem:[%s2] sm:$0xff]
    %v35 = vld [vmem:[%s2 + $0x8] sm:$0xff]
    %v36 = vld [vmem:[%s2 + $0x10] sm:$0xff]
    %v37 = vld [vmem:[%s2 + $0x18] sm:$0xff]
    %39 = vset.pattern.permute.xlu0 0
    %40 = vperm.xlu0 %39, %v30
    %v41 = vpop.permute.xlu0 %40
    %44 = vset.pattern.permute.xlu0 0
    %45 = vperm.xlu0 %44, %v31
    %v46 = vpop.permute.xlu0 %45
    %49 = vset.pattern.permute.xlu0 0
    %50 = vperm.xlu0 %49, %v32
    %v51 = vpop.permute.xlu0 %50
    %54 = vset.pattern.permute.xlu0 0
    %55 = vperm.xlu0 %54, %v33
    %v56 = vpop.permute.xlu0 %55
    %v58 = vlaneseq
    %v59 = vshrl.u32 %v58, 7
    %v60 = vsub.s32 0, %v59
    %v61 = vrot.slane %v29, %v60
    %v62 = vmul.f32 %v41, %v61
    %v63 = vmul.f32 %v46, %v61
    %v64 = vmul.f32 %v51, %v61
    %v65 = vmul.f32 %v56, %v61
    %66 = vset.pattern.permute.xlu0 1
    %67 = vperm.xlu0 %66, %v30
    %v68 = vpop.permute.xlu0 %67
    %70 = vset.pattern.permute.xlu0 1
    %71 = vperm.xlu0 %70, %v31
    %v72 = vpop.permute.xlu0 %71
    %74 = vset.pattern.permute.xlu0 1
    %75 = vperm.xlu0 %74, %v32
    %v76 = vpop.permute.xlu0 %75
    %78 = vset.pattern.permute.xlu0 1
    %79 = vperm.xlu0 %78, %v33
    %v80 = vpop.permute.xlu0 %79
    %v82 = vlaneseq
    %v83 = vshrl.u32 %v82, 7
    %v84 = vsub.s32 1, %v83
    %v85 = vrot.slane %v29, %v84
    %v86 = vmul.f32 %v68, %v85
    %v87 = vmul.f32 %v72, %v85
    %v88 = vmul.f32 %v76, %v85
    %v89 = vmul.f32 %v80, %v85
    %v90 = vadd.f32 %v62, %v86
    %v91 = vadd.f32 %v63, %v87
    %v92 = vadd.f32 %v64, %v88
    %v93 = vadd.f32 %v65, %v89
    %95 = vset.pattern.permute.xlu0 0
    %96 = vperm.xlu0 %95, %v34
    %v97 = vpop.permute.xlu0 %96
    %100 = vset.pattern.permute.xlu0 0
    %101 = vperm.xlu0 %100, %v35
    %v102 = vpop.permute.xlu0 %101
    %105 = vset.pattern.permute.xlu0 0
    %106 = vperm.xlu0 %105, %v36
    %v107 = vpop.permute.xlu0 %106
    %110 = vset.pattern.permute.xlu0 0
    %111 = vperm.xlu0 %110, %v37
    %v112 = vpop.permute.xlu0 %111
    %v114 = vadd.f32 %v90, %v97
    %v115 = vadd.f32 %v91, %v102
    %v116 = vadd.f32 %v92, %v107
    %v117 = vadd.f32 %v93, %v112
    %v118 = vtanh.pop %v114
    %v119 = vtanh.pop %v115
    %v120 = vtanh.pop %v116
    %v121 = vtanh.pop %v117
    %v122 = vld [vmem:[%s3] sm:$0xff]
    %v123 = vld [vmem:[%s3 + $0x8] sm:$0xff]
    %v124 = vld [vmem:[%s3 + $0x10] sm:$0xff]
    %v125 = vld [vmem:[%s3 + $0x18] sm:$0xff]
    %v126 = vld [vmem:[%s4] sm:$0xff]
    %v127 = vld [vmem:[%s4 + $0x8] sm:$0xff]
    %v128 = vld [vmem:[%s4 + $0x10] sm:$0xff]
    %v129 = vld [vmem:[%s4 + $0x18] sm:$0xff]
    %131 = vset.pattern.permute.xlu0 0
    %132 = vperm.xlu0 %131, %v126
    %v133 = vpop.permute.xlu0 %132
    %136 = vset.pattern.permute.xlu0 0
    %137 = vperm.xlu0 %136, %v127
    %v138 = vpop.permute.xlu0 %137
    %141 = vset.pattern.permute.xlu0 0
    %142 = vperm.xlu0 %141, %v128
    %v143 = vpop.permute.xlu0 %142
    %146 = vset.pattern.permute.xlu0 0
    %147 = vperm.xlu0 %146, %v129
    %v148 = vpop.permute.xlu0 %147
    %vm150 = vcmask 261120
    %v152 = vsel %vm150, %v122, 0
    %v155 = vsel %vm150, %v123, 0
    %v158 = vsel %vm150, %v124, 0
    %v161 = vsel %vm150, %v125, 0
    %163 = vmatprep.subr.mxu0 0.0
    %v164 = vand.u32 %v118, 4294901760
    %165 = vmatpush1.msra.mxu0 %v164
    %166 = vmatprep.subr.mxu0 0.0
    %v167 = vand.u32 %v119, 4294901760
    %168 = vmatpush1.msra.mxu0 %v167
    %169 = vmatprep.subr.mxu0 0.0
    %v170 = vand.u32 %v120, 4294901760
    %171 = vmatpush1.msra.mxu0 %v170
    %172 = vmatprep.subr.mxu0 0.0
    %v173 = vand.u32 %v121, 4294901760
    %174 = vmatpush1.msra.mxu0 %v173
    %175 = vmatprep.subr.mxu0 0.0
    %176 = vmatpush1.msra.mxu0 0.0
    %177 = vmatprep.subr.mxu0 0.0
    %178 = vmatpush1.msra.mxu0 0.0
    %179 = vmatprep.subr.mxu0 0.0
    %180 = vmatpush1.msra.mxu0 0.0
    %181 = vmatprep.subr.mxu0 0.0
    %182 = vmatpush1.msra.mxu0 0.0
    %183 = vmatprep.subr.mxu0 0.0
    %184 = vmatpush1.msra.mxu0 0.0
    %185 = vmatprep.subr.mxu0 0.0
    %186 = vmatpush1.msra.mxu0 0.0
    %187 = vmatprep.subr.mxu0 0.0
    %188 = vmatpush1.msra.mxu0 0.0
    %189 = vmatprep.subr.mxu0 0.0
    %190 = vmatpush1.msra.mxu0 0.0
    %191 = vmatprep.subr.mxu0 0.0
    %192 = vmatpush1.msra.mxu0 0.0
    %193 = vmatprep.subr.mxu0 0.0
    %194 = vmatpush1.msra.mxu0 0.0
    %195 = vmatprep.subr.mxu0 0.0
    %196 = vmatpush1.msra.mxu0 0.0
    %197 = vmatprep.subr.mxu0 0.0
    %198 = vmatpush1.msra.mxu0 0.0
    %199 = vmatprep.subr.mxu0 0.0
    %200 = vmatpush1.msra.mxu0 0.0
    %201 = vmatprep.subr.mxu0 0.0
    %202 = vmatpush1.msra.mxu0 0.0
    %203 = vmatprep.subr.mxu0 0.0
    %204 = vmatpush1.msra.mxu0 0.0
    %205 = vmatprep.subr.mxu0 0.0
    %206 = vmatpush1.msra.mxu0 0.0
    %207 = vmatprep.subr.mxu0 0.0
    %208 = vmatpush1.msra.mxu0 0.0
    %209 = vmatprep.subr.mxu0 0.0
    %210 = vmatpush1.msra.mxu0 0.0
    %211 = vmatprep.subr.mxu0 0.0
    %212 = vmatpush1.msra.mxu0 0.0
    %213 = vmatprep.subr.mxu0 0.0
    %214 = vmatpush1.msra.mxu0 0.0
    %215 = vmatprep.subr.mxu0 0.0
    %216 = vmatpush1.msra.mxu0 0.0
    %217 = vmatprep.subr.mxu0 0.0
    %218 = vmatpush1.msra.mxu0 0.0
    %219 = vmatprep.subr.mxu0 0.0
    %220 = vmatpush1.msra.mxu0 0.0
    %221 = vmatprep.subr.mxu0 0.0
    %222 = vmatpush1.msra.mxu0 0.0
    %223 = vmatprep.subr.mxu0 0.0
    %224 = vmatpush1.msra.mxu0 0.0
    %225 = vmatprep.subr.mxu0 0.0
    %226 = vmatpush1.msra.mxu0 0.0
    %227 = vmatprep.subr.mxu0 0.0
    %228 = vmatpush1.msra.mxu0 0.0
    %229 = vmatprep.subr.mxu0 0.0
    %230 = vmatpush1.msra.mxu0 0.0
    %231 = vmatprep.mubr.f32.mxu0 0.0
    %v232 = vand.u32 %v152, 4294901760
    %v233 = vsub.f32 %v152, %v232
    %v234 = vand.u32 %v233, 4294901760
    %v235 = vsub.f32 %v233, %v234
    %v236 = vand.u32 %v235, 4294901760
    %237 = vmatmul.mubr.f32.gmra.mrb[0].mxu0 %v236
    %v238 = vpop.f32.mrb[0].mxu0
    %v239 = vadd.f32 %v133, %v238
    %v240 = vpop.f32.mrb[0].mxu0
    %241 = vmatprep.mubr.f32.mxu0 0.0
    %v242 = vand.u32 %v155, 4294901760
    %v243 = vsub.f32 %v155, %v242
    %v244 = vand.u32 %v243, 4294901760
    %v245 = vsub.f32 %v243, %v244
    %v246 = vand.u32 %v245, 4294901760
    %247 = vmatmul.mubr.f32.gmra.mrb[0].mxu0 %v246
    %v248 = vpop.f32.mrb[0].mxu0
    %v249 = vadd.f32 %v138, %v248
    %v250 = vpop.f32.mrb[0].mxu0
    %251 = vmatprep.mubr.f32.mxu0 0.0
    %v252 = vand.u32 %v158, 4294901760
    %v253 = vsub.f32 %v158, %v252
    %v254 = vand.u32 %v253, 4294901760
    %v255 = vsub.f32 %v253, %v254
    %v256 = vand.u32 %v255, 4294901760
    %257 = vmatmul.mubr.f32.gmra.mrb[0].mxu0 %v256
    %v258 = vpop.f32.mrb[0].mxu0
    %v259 = vadd.f32 %v143, %v258
    %v260 = vpop.f32.mrb[0].mxu0
    %261 = vmatprep.mubr.f32.mxu0 0.0
    %v262 = vand.u32 %v161, 4294901760
    %v263 = vsub.f32 %v161, %v262
    %v264 = vand.u32 %v263, 4294901760
    %v265 = vsub.f32 %v263, %v264
    %v266 = vand.u32 %v265, 4294901760
    %267 = vmatmul.mubr.f32.gmra.mrb[0].mxu0 %v266
    %v268 = vpop.f32.mrb[0].mxu0
    %v269 = vadd.f32 %v148, %v268
    %v270 = vpop.f32.mrb[0].mxu0
    %271 = vdwg.mxu0
    %272 = vmatprep.subr.mxu0 0.0
    %v273 = vand.u32 %v118, 4294901760
    %v274 = vsub.f32 %v118, %v273
    %v275 = vand.u32 %v274, 4294901760
    %v276 = vsub.f32 %v274, %v275
    %v277 = vand.u32 %v276, 4294901760
    %278 = vmatpush1.msra.mxu0 %v277
    %279 = vmatprep.subr.mxu0 0.0
    %v280 = vand.u32 %v119, 4294901760
    %v281 = vsub.f32 %v119, %v280
    %v282 = vand.u32 %v281, 4294901760
    %v283 = vsub.f32 %v281, %v282
    %v284 = vand.u32 %v283, 4294901760
    %285 = vmatpush1.msra.mxu0 %v284
    %286 = vmatprep.subr.mxu0 0.0
    %v287 = vand.u32 %v120, 4294901760
    %v288 = vsub.f32 %v120, %v287
    %v289 = vand.u32 %v288, 4294901760
    %v290 = vsub.f32 %v288, %v289
    %v291 = vand.u32 %v290, 4294901760
    %292 = vmatpush1.msra.mxu0 %v291
    %293 = vmatprep.subr.mxu0 0.0
    %v294 = vand.u32 %v121, 4294901760
    %v295 = vsub.f32 %v121, %v294
    %v296 = vand.u32 %v295, 4294901760
    %v297 = vsub.f32 %v295, %v296
    %v298 = vand.u32 %v297, 4294901760
    %299 = vmatpush1.msra.mxu0 %v298
    %300 = vmatprep.subr.mxu0 0.0
    %301 = vmatpush1.msra.mxu0 0.0
    %302 = vmatprep.subr.mxu0 0.0
    %303 = vmatpush1.msra.mxu0 0.0
    %304 = vmatprep.subr.mxu0 0.0
    %305 = vmatpush1.msra.mxu0 0.0
    %306 = vmatprep.subr.mxu0 0.0
    %307 = vmatpush1.msra.mxu0 0.0
    %308 = vmatprep.subr.mxu0 0.0
    %309 = vmatpush1.msra.mxu0 0.0
    %310 = vmatprep.subr.mxu0 0.0
    %311 = vmatpush1.msra.mxu0 0.0
    %312 = vmatprep.subr.mxu0 0.0
    %313 = vmatpush1.msra.mxu0 0.0
    %314 = vmatprep.subr.mxu0 0.0
    %315 = vmatpush1.msra.mxu0 0.0
    %316 = vmatprep.subr.mxu0 0.0
    %317 = vmatpush1.msra.mxu0 0.0
    %318 = vmatprep.subr.mxu0 0.0
    %319 = vmatpush1.msra.mxu0 0.0
    %320 = vmatprep.subr.mxu0 0.0
    %321 = vmatpush1.msra.mxu0 0.0
    %322 = vmatprep.subr.mxu0 0.0
    %323 = vmatpush1.msra.mxu0 0.0
    %324 = vmatprep.subr.mxu0 0.0
    %325 = vmatpush1.msra.mxu0 0.0
    %326 = vmatprep.subr.mxu0 0.0
    %327 = vmatpush1.msra.mxu0 0.0
    %328 = vmatprep.subr.mxu0 0.0
    %329 = vmatpush1.msra.mxu0 0.0
    %330 = vmatprep.subr.mxu0 0.0
    %331 = vmatpush1.msra.mxu0 0.0
    %332 = vmatprep.subr.mxu0 0.0
    %333 = vmatpush1.msra.mxu0 0.0
    %334 = vmatprep.subr.mxu0 0.0
    %335 = vmatpush1.msra.mxu0 0.0
    %336 = vmatprep.subr.mxu0 0.0
    %337 = vmatpush1.msra.mxu0 0.0
    %338 = vmatprep.subr.mxu0 0.0
    %339 = vmatpush1.msra.mxu0 0.0
    %340 = vmatprep.subr.mxu0 0.0
    %341 = vmatpush1.msra.mxu0 0.0
    %342 = vmatprep.subr.mxu0 0.0
    %343 = vmatpush1.msra.mxu0 0.0
    %344 = vmatprep.subr.mxu0 0.0
    %345 = vmatpush1.msra.mxu0 0.0
    %346 = vmatprep.subr.mxu0 0.0
    %347 = vmatpush1.msra.mxu0 0.0
    %348 = vmatprep.subr.mxu0 0.0
    %349 = vmatpush1.msra.mxu0 0.0
    %350 = vmatprep.subr.mxu0 0.0
    %351 = vmatpush1.msra.mxu0 0.0
    %352 = vmatprep.subr.mxu0 0.0
    %353 = vmatpush1.msra.mxu0 0.0
    %354 = vmatprep.subr.mxu0 0.0
    %355 = vmatpush1.msra.mxu0 0.0
    %356 = vmatprep.mubr.f32.mxu0 0.0
    %v357 = vand.u32 %v152, 4294901760
    %358 = vmatmul.mubr.f32.gmra.mrb[0].mxu0 %v357
    %v359 = vpop.f32.mrb[0].mxu0
    %v360 = vadd.f32 %v239, %v359
    %v361 = vpop.f32.mrb[0].mxu0
    %362 = vmatprep.mubr.f32.mxu0 0.0
    %v363 = vand.u32 %v155, 4294901760
    %364 = vmatmul.mubr.f32.gmra.mrb[0].mxu0 %v363
    %v365 = vpop.f32.mrb[0].mxu0
    %v366 = vadd.f32 %v249, %v365
    %v367 = vpop.f32.mrb[0].mxu0
    %368 = vmatprep.mubr.f32.mxu0 0.0
    %v369 = vand.u32 %v158, 4294901760
    %370 = vmatmul.mubr.f32.gmra.mrb[0].mxu0 %v369
    %v371 = vpop.f32.mrb[0].mxu0
    %v372 = vadd.f32 %v259, %v371
    %v373 = vpop.f32.mrb[0].mxu0
    %374 = vmatprep.mubr.f32.mxu0 0.0
    %v375 = vand.u32 %v161, 4294901760
    %376 = vmatmul.mubr.f32.gmra.mrb[0].mxu0 %v375
    %v377 = vpop.f32.mrb[0].mxu0
    %v378 = vadd.f32 %v269, %v377
    %v379 = vpop.f32.mrb[0].mxu0
    %380 = vdwg.mxu0
    %381 = vmatprep.subr.mxu0 0.0
    %v382 = vand.u32 %v118, 4294901760
    %v383 = vsub.f32 %v118, %v382
    %384 = vmatpush1.msra.mxu0 %v383
    %385 = vmatprep.subr.mxu0 0.0
    %v386 = vand.u32 %v119, 4294901760
    %v387 = vsub.f32 %v119, %v386
    %388 = vmatpush1.msra.mxu0 %v387
    %389 = vmatprep.subr.mxu0 0.0
    %v390 = vand.u32 %v120, 4294901760
    %v391 = vsub.f32 %v120, %v390
    %392 = vmatpush1.msra.mxu0 %v391
    %393 = vmatprep.subr.mxu0 0.0
    %v394 = vand.u32 %v121, 4294901760
    %v395 = vsub.f32 %v121, %v394
    %396 = vmatpush1.msra.mxu0 %v395
    %397 = vmatprep.subr.mxu0 0.0
    %398 = vmatpush1.msra.mxu0 0.0
    %399 = vmatprep.subr.mxu0 0.0
    %400 = vmatpush1.msra.mxu0 0.0
    %401 = vmatprep.subr.mxu0 0.0
    %402 = vmatpush1.msra.mxu0 0.0
    %403 = vmatprep.subr.mxu0 0.0
    %404 = vmatpush1.msra.mxu0 0.0
    %405 = vmatprep.subr.mxu0 0.0
    %406 = vmatpush1.msra.mxu0 0.0
    %407 = vmatprep.subr.mxu0 0.0
    %408 = vmatpush1.msra.mxu0 0.0
    %409 = vmatprep.subr.mxu0 0.0
    %410 = vmatpush1.msra.mxu0 0.0
    %411 = vmatprep.subr.mxu0 0.0
    %412 = vmatpush1.msra.mxu0 0.0
    %413 = vmatprep.subr.mxu0 0.0
    %414 = vmatpush1.msra.mxu0 0.0
    %415 = vmatprep.subr.mxu0 0.0
    %416 = vmatpush1.msra.mxu0 0.0
    %417 = vmatprep.subr.mxu0 0.0
    %418 = vmatpush1.msra.mxu0 0.0
    %419 = vmatprep.subr.mxu0 0.0
    %420 = vmatpush1.msra.mxu0 0.0
    %421 = vmatprep.subr.mxu0 0.0
    %422 = vmatpush1.msra.mxu0 0.0
    %423 = vmatprep.subr.mxu0 0.0
    %424 = vmatpush1.msra.mxu0 0.0
    %425 = vmatprep.subr.mxu0 0.0
    %426 = vmatpush1.msra.mxu0 0.0
    %427 = vmatprep.subr.mxu0 0.0
    %428 = vmatpush1.msra.mxu0 0.0
    %429 = vmatprep.subr.mxu0 0.0
    %430 = vmatpush1.msra.mxu0 0.0
    %431 = vmatprep.subr.mxu0 0.0
    %432 = vmatpush1.msra.mxu0 0.0
    %433 = vmatprep.subr.mxu0 0.0
    %434 = vmatpush1.msra.mxu0 0.0
    %435 = vmatprep.subr.mxu0 0.0
    %436 = vmatpush1.msra.mxu0 0.0
    %437 = vmatprep.subr.mxu0 0.0
    %438 = vmatpush1.msra.mxu0 0.0
    %439 = vmatprep.subr.mxu0 0.0
    %440 = vmatpush1.msra.mxu0 0.0
    %441 = vmatprep.subr.mxu0 0.0
    %442 = vmatpush1.msra.mxu0 0.0
    %443 = vmatprep.subr.mxu0 0.0
    %444 = vmatpush1.msra.mxu0 0.0
    %445 = vmatprep.subr.mxu0 0.0
    %446 = vmatpush1.msra.mxu0 0.0
    %447 = vmatprep.subr.mxu0 0.0
    %448 = vmatpush1.msra.mxu0 0.0
    %449 = vmatprep.subr.mxu0 0.0
    %450 = vmatpush1.msra.mxu0 0.0
    %451 = vmatprep.subr.mxu0 0.0
    %452 = vmatpush1.msra.mxu0 0.0
    %453 = vmatprep.mubr.f32.mxu0 0.0
    %v454 = vand.u32 %v152, 4294901760
    %v455 = vsub.f32 %v152, %v454
    %456 = vmatmul.mubr.f32.gmra.mrb[0].mxu0 %v455
    %v457 = vpop.f32.mrb[0].mxu0
    %v458 = vadd.f32 %v360, %v457
    %v459 = vpop.f32.mrb[0].mxu0
    %460 = vmatprep.mubr.f32.mxu0 0.0
    %v461 = vand.u32 %v155, 4294901760
    %v462 = vsub.f32 %v155, %v461
    %463 = vmatmul.mubr.f32.gmra.mrb[0].mxu0 %v462
    %v464 = vpop.f32.mrb[0].mxu0
    %v465 = vadd.f32 %v366, %v464
    %v466 = vpop.f32.mrb[0].mxu0
    %467 = vmatprep.mubr.f32.mxu0 0.0
    %v468 = vand.u32 %v158, 4294901760
    %v469 = vsub.f32 %v158, %v468
    %470 = vmatmul.mubr.f32.gmra.mrb[0].mxu0 %v469
    %v471 = vpop.f32.mrb[0].mxu0
    %v472 = vadd.f32 %v372, %v471
    %v473 = vpop.f32.mrb[0].mxu0
    %474 = vmatprep.mubr.f32.mxu0 0.0
    %v475 = vand.u32 %v161, 4294901760
    %v476 = vsub.f32 %v161, %v475
    %477 = vmatmul.mubr.f32.gmra.mrb[0].mxu0 %v476
    %v478 = vpop.f32.mrb[0].mxu0
    %v479 = vadd.f32 %v378, %v478
    %v480 = vpop.f32.mrb[0].mxu0
    %481 = vdwg.mxu0
    %482 = vmatprep.subr.mxu0 0.0
    %v483 = vand.u32 %v118, 4294901760
    %484 = vmatpush1.msra.mxu0 %v483
    %485 = vmatprep.subr.mxu0 0.0
    %v486 = vand.u32 %v119, 4294901760
    %487 = vmatpush1.msra.mxu0 %v486
    %488 = vmatprep.subr.mxu0 0.0
    %v489 = vand.u32 %v120, 4294901760
    %490 = vmatpush1.msra.mxu0 %v489
    %491 = vmatprep.subr.mxu0 0.0
    %v492 = vand.u32 %v121, 4294901760
    %493 = vmatpush1.msra.mxu0 %v492
    %494 = vmatprep.subr.mxu0 0.0
    %495 = vmatpush1.msra.mxu0 0.0
    %496 = vmatprep.subr.mxu0 0.0
    %497 = vmatpush1.msra.mxu0 0.0
    %498 = vmatprep.subr.mxu0 0.0
    %499 = vmatpush1.msra.mxu0 0.0
    %500 = vmatprep.subr.mxu0 0.0
    %501 = vmatpush1.msra.mxu0 0.0
    %502 = vmatprep.subr.mxu0 0.0
    %503 = vmatpush1.msra.mxu0 0.0
    %504 = vmatprep.subr.mxu0 0.0
    %505 = vmatpush1.msra.mxu0 0.0
    %506 = vmatprep.subr.mxu0 0.0
    %507 = vmatpush1.msra.mxu0 0.0
    %508 = vmatprep.subr.mxu0 0.0
    %509 = vmatpush1.msra.mxu0 0.0
    %510 = vmatprep.subr.mxu0 0.0
    %511 = vmatpush1.msra.mxu0 0.0
    %512 = vmatprep.subr.mxu0 0.0
    %513 = vmatpush1.msra.mxu0 0.0
    %514 = vmatprep.subr.mxu0 0.0
    %515 = vmatpush1.msra.mxu0 0.0
    %516 = vmatprep.subr.mxu0 0.0
    %517 = vmatpush1.msra.mxu0 0.0
    %518 = vmatprep.subr.mxu0 0.0
    %519 = vmatpush1.msra.mxu0 0.0
    %520 = vmatprep.subr.mxu0 0.0
    %521 = vmatpush1.msra.mxu0 0.0
    %522 = vmatprep.subr.mxu0 0.0
    %523 = vmatpush1.msra.mxu0 0.0
    %524 = vmatprep.subr.mxu0 0.0
    %525 = vmatpush1.msra.mxu0 0.0
    %526 = vmatprep.subr.mxu0 0.0
    %527 = vmatpush1.msra.mxu0 0.0
    %528 = vmatprep.subr.mxu0 0.0
    %529 = vmatpush1.msra.mxu0 0.0
    %530 = vmatprep.subr.mxu0 0.0
    %531 = vmatpush1.msra.mxu0 0.0
    %532 = vmatprep.subr.mxu0 0.0
    %533 = vmatpush1.msra.mxu0 0.0
    %534 = vmatprep.subr.mxu0 0.0
    %535 = vmatpush1.msra.mxu0 0.0
    %536 = vmatprep.subr.mxu0 0.0
    %537 = vmatpush1.msra.mxu0 0.0
    %538 = vmatprep.subr.mxu0 0.0
    %539 = vmatpush1.msra.mxu0 0.0
    %540 = vmatprep.subr.mxu0 0.0
    %541 = vmatpush1.msra.mxu0 0.0
    %542 = vmatprep.subr.mxu0 0.0
    %543 = vmatpush1.msra.mxu0 0.0
    %544 = vmatprep.subr.mxu0 0.0
    %545 = vmatpush1.msra.mxu0 0.0
    %546 = vmatprep.subr.mxu0 0.0
    %547 = vmatpush1.msra.mxu0 0.0
    %548 = vmatprep.subr.mxu0 0.0
    %549 = vmatpush1.msra.mxu0 0.0
    %550 = vmatprep.mubr.f32.mxu0 0.0
    %v551 = vand.u32 %v152, 4294901760
    %v552 = vsub.f32 %v152, %v551
    %v553 = vand.u32 %v552, 4294901760
    %554 = vmatmul.mubr.f32.gmra.mrb[0].mxu0 %v553
    %v555 = vpop.f32.mrb[0].mxu0
    %v556 = vadd.f32 %v458, %v555
    %v557 = vpop.f32.mrb[0].mxu0
    %558 = vmatprep.mubr.f32.mxu0 0.0
    %v559 = vand.u32 %v155, 4294901760
    %v560 = vsub.f32 %v155, %v559
    %v561 = vand.u32 %v560, 4294901760
    %562 = vmatmul.mubr.f32.gmra.mrb[0].mxu0 %v561
    %v563 = vpop.f32.mrb[0].mxu0
    %v564 = vadd.f32 %v465, %v563
    %v565 = vpop.f32.mrb[0].mxu0
    %566 = vmatprep.mubr.f32.mxu0 0.0
    %v567 = vand.u32 %v158, 4294901760
    %v568 = vsub.f32 %v158, %v567
    %v569 = vand.u32 %v568, 4294901760
    %570 = vmatmul.mubr.f32.gmra.mrb[0].mxu0 %v569
    %v571 = vpop.f32.mrb[0].mxu0
    %v572 = vadd.f32 %v472, %v571
    %v573 = vpop.f32.mrb[0].mxu0
    %574 = vmatprep.mubr.f32.mxu0 0.0
    %v575 = vand.u32 %v161, 4294901760
    %v576 = vsub.f32 %v161, %v575
    %v577 = vand.u32 %v576, 4294901760
    %578 = vmatmul.mubr.f32.gmra.mrb[0].mxu0 %v577
    %v579 = vpop.f32.mrb[0].mxu0
    %v580 = vadd.f32 %v479, %v579
    %v581 = vpop.f32.mrb[0].mxu0
    %582 = vdwg.mxu0
    %583 = vmatprep.subr.mxu0 0.0
    %v584 = vand.u32 %v118, 4294901760
    %v585 = vsub.f32 %v118, %v584
    %v586 = vand.u32 %v585, 4294901760
    %587 = vmatpush1.msra.mxu0 %v586
    %588 = vmatprep.subr.mxu0 0.0
    %v589 = vand.u32 %v119, 4294901760
    %v590 = vsub.f32 %v119, %v589
    %v591 = vand.u32 %v590, 4294901760
    %592 = vmatpush1.msra.mxu0 %v591
    %593 = vmatprep.subr.mxu0 0.0
    %v594 = vand.u32 %v120, 4294901760
    %v595 = vsub.f32 %v120, %v594
    %v596 = vand.u32 %v595, 4294901760
    %597 = vmatpush1.msra.mxu0 %v596
    %598 = vmatprep.subr.mxu0 0.0
    %v599 = vand.u32 %v121, 4294901760
    %v600 = vsub.f32 %v121, %v599
    %v601 = vand.u32 %v600, 4294901760
    %602 = vmatpush1.msra.mxu0 %v601
    %603 = vmatprep.subr.mxu0 0.0
    %604 = vmatpush1.msra.mxu0 0.0
    %605 = vmatprep.subr.mxu0 0.0
    %606 = vmatpush1.msra.mxu0 0.0
    %607 = vmatprep.subr.mxu0 0.0
    %608 = vmatpush1.msra.mxu0 0.0
    %609 = vmatprep.subr.mxu0 0.0
    %610 = vmatpush1.msra.mxu0 0.0
    %611 = vmatprep.subr.mxu0 0.0
    %612 = vmatpush1.msra.mxu0 0.0
    %613 = vmatprep.subr.mxu0 0.0
    %614 = vmatpush1.msra.mxu0 0.0
    %615 = vmatprep.subr.mxu0 0.0
    %616 = vmatpush1.msra.mxu0 0.0
    %617 = vmatprep.subr.mxu0 0.0
    %618 = vmatpush1.msra.mxu0 0.0
    %619 = vmatprep.subr.mxu0 0.0
    %620 = vmatpush1.msra.mxu0 0.0
    %621 = vmatprep.subr.mxu0 0.0
    %622 = vmatpush1.msra.mxu0 0.0
    %623 = vmatprep.subr.mxu0 0.0
    %624 = vmatpush1.msra.mxu0 0.0
    %625 = vmatprep.subr.mxu0 0.0
    %626 = vmatpush1.msra.mxu0 0.0
    %627 = vmatprep.subr.mxu0 0.0
    %628 = vmatpush1.msra.mxu0 0.0
    %629 = vmatprep.subr.mxu0 0.0
    %630 = vmatpush1.msra.mxu0 0.0
    %631 = vmatprep.subr.mxu0 0.0
    %632 = vmatpush1.msra.mxu0 0.0
    %633 = vmatprep.subr.mxu0 0.0
    %634 = vmatpush1.msra.mxu0 0.0
    %635 = vmatprep.subr.mxu0 0.0
    %636 = vmatpush1.msra.mxu0 0.0
    %637 = vmatprep.subr.mxu0 0.0
    %638 = vmatpush1.msra.mxu0 0.0
    %639 = vmatprep.subr.mxu0 0.0
    %640 = vmatpush1.msra.mxu0 0.0
    %641 = vmatprep.subr.mxu0 0.0
    %642 = vmatpush1.msra.mxu0 0.0
    %643 = vmatprep.subr.mxu0 0.0
    %644 = vmatpush1.msra.mxu0 0.0
    %645 = vmatprep.subr.mxu0 0.0
    %646 = vmatpush1.msra.mxu0 0.0
    %647 = vmatprep.subr.mxu0 0.0
    %648 = vmatpush1.msra.mxu0 0.0
    %649 = vmatprep.subr.mxu0 0.0
    %650 = vmatpush1.msra.mxu0 0.0
    %651 = vmatprep.subr.mxu0 0.0
    %652 = vmatpush1.msra.mxu0 0.0
    %653 = vmatprep.subr.mxu0 0.0
    %654 = vmatpush1.msra.mxu0 0.0
    %655 = vmatprep.subr.mxu0 0.0
    %656 = vmatpush1.msra.mxu0 0.0
    %657 = vmatprep.subr.mxu0 0.0
    %658 = vmatpush1.msra.mxu0 0.0
    %659 = vmatprep.mubr.f32.mxu0 0.0
    %v660 = vand.u32 %v152, 4294901760
    %661 = vmatmul.mubr.f32.gmra.mrb[0].mxu0 %v660
    %v662 = vpop.f32.mrb[0].mxu0
    %v663 = vadd.f32 %v556, %v662
    %v664 = vpop.f32.mrb[0].mxu0
    %665 = vmatprep.mubr.f32.mxu0 0.0
    %v666 = vand.u32 %v155, 4294901760
    %667 = vmatmul.mubr.f32.gmra.mrb[0].mxu0 %v666
    %v668 = vpop.f32.mrb[0].mxu0
    %v669 = vadd.f32 %v564, %v668
    %v670 = vpop.f32.mrb[0].mxu0
    %671 = vmatprep.mubr.f32.mxu0 0.0
    %v672 = vand.u32 %v158, 4294901760
    %673 = vmatmul.mubr.f32.gmra.mrb[0].mxu0 %v672
    %v674 = vpop.f32.mrb[0].mxu0
    %v675 = vadd.f32 %v572, %v674
    %v676 = vpop.f32.mrb[0].mxu0
    %677 = vmatprep.mubr.f32.mxu0 0.0
    %v678 = vand.u32 %v161, 4294901760
    %679 = vmatmul.mubr.f32.gmra.mrb[0].mxu0 %v678
    %v680 = vpop.f32.mrb[0].mxu0
    %v681 = vadd.f32 %v580, %v680
    %v682 = vpop.f32.mrb[0].mxu0
    %683 = vdwg.mxu0
    %684 = vmatprep.subr.mxu0 0.0
    %v685 = vand.u32 %v118, 4294901760
    %686 = vmatpush1.msra.mxu0 %v685
    %687 = vmatprep.subr.mxu0 0.0
    %v688 = vand.u32 %v119, 4294901760
    %689 = vmatpush1.msra.mxu0 %v688
    %690 = vmatprep.subr.mxu0 0.0
    %v691 = vand.u32 %v120, 4294901760
    %692 = vmatpush1.msra.mxu0 %v691
    %693 = vmatprep.subr.mxu0 0.0
    %v694 = vand.u32 %v121, 4294901760
    %695 = vmatpush1.msra.mxu0 %v694
    %696 = vmatprep.subr.mxu0 0.0
    %697 = vmatpush1.msra.mxu0 0.0
    %698 = vmatprep.subr.mxu0 0.0
    %699 = vmatpush1.msra.mxu0 0.0
    %700 = vmatprep.subr.mxu0 0.0
    %701 = vmatpush1.msra.mxu0 0.0
    %702 = vmatprep.subr.mxu0 0.0
    %703 = vmatpush1.msra.mxu0 0.0
    %704 = vmatprep.subr.mxu0 0.0
    %705 = vmatpush1.msra.mxu0 0.0
    %706 = vmatprep.subr.mxu0 0.0
    %707 = vmatpush1.msra.mxu0 0.0
    %708 = vmatprep.subr.mxu0 0.0
    %709 = vmatpush1.msra.mxu0 0.0
    %710 = vmatprep.subr.mxu0 0.0
    %711 = vmatpush1.msra.mxu0 0.0
    %712 = vmatprep.subr.mxu0 0.0
    %713 = vmatpush1.msra.mxu0 0.0
    %714 = vmatprep.subr.mxu0 0.0
    %715 = vmatpush1.msra.mxu0 0.0
    %716 = vmatprep.subr.mxu0 0.0
    %717 = vmatpush1.msra.mxu0 0.0
    %718 = vmatprep.subr.mxu0 0.0
    %719 = vmatpush1.msra.mxu0 0.0
    %720 = vmatprep.subr.mxu0 0.0
    %721 = vmatpush1.msra.mxu0 0.0
    %722 = vmatprep.subr.mxu0 0.0
    %723 = vmatpush1.msra.mxu0 0.0
    %724 = vmatprep.subr.mxu0 0.0
    %725 = vmatpush1.msra.mxu0 0.0
    %726 = vmatprep.subr.mxu0 0.0
    %727 = vmatpush1.msra.mxu0 0.0
    %728 = vmatprep.subr.mxu0 0.0
    %729 = vmatpush1.msra.mxu0 0.0
    %730 = vmatprep.subr.mxu0 0.0
    %731 = vmatpush1.msra.mxu0 0.0
    %732 = vmatprep.subr.mxu0 0.0
    %733 = vmatpush1.msra.mxu0 0.0
    %734 = vmatprep.subr.mxu0 0.0
    %735 = vmatpush1.msra.mxu0 0.0
    %736 = vmatprep.subr.mxu0 0.0
    %737 = vmatpush1.msra.mxu0 0.0
    %738 = vmatprep.subr.mxu0 0.0
    %739 = vmatpush1.msra.mxu0 0.0
    %740 = vmatprep.subr.mxu0 0.0
    %741 = vmatpush1.msra.mxu0 0.0
    %742 = vmatprep.subr.mxu0 0.0
    %743 = vmatpush1.msra.mxu0 0.0
    %744 = vmatprep.subr.mxu0 0.0
    %745 = vmatpush1.msra.mxu0 0.0
    %746 = vmatprep.subr.mxu0 0.0
    %747 = vmatpush1.msra.mxu0 0.0
    %748 = vmatprep.subr.mxu0 0.0
    %749 = vmatpush1.msra.mxu0 0.0
    %750 = vmatprep.subr.mxu0 0.0
    %751 = vmatpush1.msra.mxu0 0.0
    %752 = vmatprep.mubr.f32.mxu0 0.0
    %v753 = vand.u32 %v152, 4294901760
    %754 = vmatmul.mubr.f32.gmra.mrb[0].mxu0 %v753
    %v755 = vpop.f32.mrb[0].mxu0
    %v756 = vadd.f32 %v663, %v755
    %v757 = vpop.f32.mrb[0].mxu0
    %758 = vmatprep.mubr.f32.mxu0 0.0
    %v759 = vand.u32 %v155, 4294901760
    %760 = vmatmul.mubr.f32.gmra.mrb[0].mxu0 %v759
    %v761 = vpop.f32.mrb[0].mxu0
    %v762 = vadd.f32 %v669, %v761
    %v763 = vpop.f32.mrb[0].mxu0
    %764 = vmatprep.mubr.f32.mxu0 0.0
    %v765 = vand.u32 %v158, 4294901760
    %766 = vmatmul.mubr.f32.gmra.mrb[0].mxu0 %v765
    %v767 = vpop.f32.mrb[0].mxu0
    %v768 = vadd.f32 %v675, %v767
    %v769 = vpop.f32.mrb[0].mxu0
    %770 = vmatprep.mubr.f32.mxu0 0.0
    %v771 = vand.u32 %v161, 4294901760
    %772 = vmatmul.mubr.f32.gmra.mrb[0].mxu0 %v771
    %v773 = vpop.f32.mrb[0].mxu0
    %v774 = vadd.f32 %v681, %v773
    %v775 = vpop.f32.mrb[0].mxu0
    %776 = vdwg.mxu0
    %v777 = vtanh.pop %v756
    %v778 = vtanh.pop %v762
    %v779 = vtanh.pop %v768
    %v780 = vtanh.pop %v774
    %v781 = vld [vmem:[%s5] sm:$0xff]
    %v782 = vld [vmem:[%s5 + $0x8] sm:$0xff]
    %v783 = vld [vmem:[%s5 + $0x10] sm:$0xff]
    %v784 = vld [vmem:[%s5 + $0x18] sm:$0xff]
    %v785 = vld [vmem:[#allocation2] sm:$0x1]
    %787 = vset.pattern.permute.xlu0 0
    %788 = vperm.xlu0 %787, %v781
    %v789 = vpop.permute.xlu0 %788
    %792 = vset.pattern.permute.xlu0 0
    %793 = vperm.xlu0 %792, %v782
    %v794 = vpop.permute.xlu0 %793
    %797 = vset.pattern.permute.xlu0 0
    %798 = vperm.xlu0 %797, %v783
    %v799 = vpop.permute.xlu0 %798
    %802 = vset.pattern.permute.xlu0 0
    %803 = vperm.xlu0 %802, %v784
    %v804 = vpop.permute.xlu0 %803
    %v806 = vmul.f32 %v789, %v777
    %v807 = vmul.f32 %v794, %v778
    %v808 = vmul.f32 %v799, %v779
    %v809 = vmul.f32 %v804, %v780
    %v810 = vadd.f32 %v806, %v807
    %v811 = vadd.f32 %v810, %v808
    %v812 = vadd.f32 %v811, %v809
    %v813 = vrot.slane %v812, 4
    %v814 = vadd.f32 %v812, %v813
    %v815 = vrot.slane %v814, 2
    %v816 = vadd.f32 %v814, %v815
    %v817 = vrot.slane %v816, 1
    %v818 = vadd.f32 %v816, %v817
    %820 = vset.pattern.permute.xlu0 0
    %821 = vperm.xlu0 %820, %v785
    %v822 = vpop.permute.xlu0 %821
    %v824 = vlaneseq
    %v825 = vshrl.u32 %v824, 7
    %v826 = vsub.s32 0, %v825
    %v827 = vrot.slane %v822, %v826
    %v828 = vadd.f32 %v818, %v827
    %829 = vst [vmem:[#allocation3] sm:$0x1] %v828
    // Predicated region
    $region30: #{tpu_custom_call.1} parent=1 // pred_check
      _
    $region31: #{tpu_custom_call.1} parent=1 // pred_check_branch
      %831 = sbr.rel (0) target = $region33
    $region32: #{tpu_custom_call.1} parent=1 // pred_region
      %s833 = ssub.s32 16, 16
      %834 = vsyncadd [#allocation4], %s833
      %s836 = sshll.u32 [#allocation3], 4
      %s837 = int_to_ptr.vmem [resolvable:$true] %s836
      %839 = dma.vmem_to_hbm [thread:$0]  %s837, 16, %s7, [#allocation4]
    $region33: #{tpu_custom_call.1} parent=1 // pred_fallthru
      _
    // Predicated region
    $region34: #{tpu_custom_call.1} parent=1 // pred_check
      _
    $region35: #{tpu_custom_call.1} parent=1 // pred_check_branch
      %841 = sbr.rel (0) target = $region37
    $region36: #{tpu_custom_call.1} parent=1 // pred_region
      %842 = dma.done [#allocation4], 16
    $region37: #{tpu_custom_call.1} parent=1 // pred_fallthru
      _
    %843 = vsyncpa [#allocation4], 1

</llo_original>
